<compile_context>
chip_gen: v7x
topology: tpu7x:2x2x1
jax: 0.10.0
libtpu: 0.0.40
codegen_flags: <defaults>
</compile_context>

<pallas_src>
import functools
import math

import jax
import jax.numpy as jnp
import numpy as np
from jax.experimental import pallas as pl
from jax.experimental.pallas import tpu as pltpu


# ----------------------------- Pallas kernel --------------------------------

def mhca_kernel(num_heads,
                x_ref, y_ref, mask_ref,
                wq_ref, bq_ref, wkv_ref, bkv_ref, wo_ref, bo_ref,
                o_ref):
    Bt, S, D = x_ref.shape
    H = num_heads
    hd = D // H
    N = Bt * S          # activation rows in this batch block
    G = H * Bt          # combined (head, batch) einsum batch dim

    x2 = x_ref[...].reshape(N, D)          # (N, D) bf16  (keys / values source)
    y2 = y_ref[...].reshape(N, D)          # (N, D) bf16  (queries source)

    # --- Full-width projections (fill the MXU; no H-replicated activations) ---
    # Wkv columns are [all K heads | all V heads]; 1/sqrt(hd) pre-folded in Wq.
    kv2 = (jnp.dot(x2, wkv_ref[...], preferred_element_type=jnp.float32)
           + bkv_ref[...]).astype(jnp.bfloat16)                       # (N, 2D)
    q2 = (jnp.dot(y2, wq_ref[...], preferred_element_type=jnp.float32)
          + bq_ref[...]).astype(jnp.bfloat16)                         # (N, D)

    k2 = kv2[:, :D]                                                   # (N, D)
    v2 = kv2[:, D:]                                                   # (N, D)

    # --- Split heads from the last axis: (N, H*hd) -> (H*Bt, S, hd) ----------
    def split_heads(t2):
        th = jnp.stack([t2[:, h * hd:(h + 1) * hd] for h in range(H)], axis=0)
        return th.reshape(G, S, hd)        # rows keep (h, b, s) order

    qh = split_heads(q2)
    kh = split_heads(k2)
    vh = split_heads(v2)

    # --- Attention scores + masked softmax (f32) -----------------------------
    scores = jnp.einsum('gqe,gke->gqk', qh, kh,
                        preferred_element_type=jnp.float32)           # (G, S, S)
    # Add the per-batch mask with a leading-dim broadcast (no H copies).
    scores = (scores.reshape(H, Bt, S, S)
              + mask_ref[...][None]).reshape(G, S, S)

    scores = scores - jnp.max(scores, axis=-1, keepdims=True)
    p = jnp.exp(scores)
    denom = jnp.sum(p, axis=-1, keepdims=True)
    p = (p * pl.reciprocal(denom, approx=True)).astype(jnp.bfloat16)  # (G, S, S)

    vals = jnp.einsum('gqk,gke->gqe', p, vh,
                      preferred_element_type=jnp.float32)             # (G, S, hd)

    # --- Merge heads back to lane axis and do ONE full-width output matmul ---
    vals_h = vals.reshape(H, N, hd)
    vals2 = jnp.concatenate([vals_h[h].astype(jnp.bfloat16) for h in range(H)],
                            axis=-1)                                  # (N, D)
    out = (jnp.dot(vals2, wo_ref[...], preferred_element_type=jnp.float32)
           + bo_ref[...])                                             # (N, D) f32

    o_ref[...] = out.reshape(Bt, S, D).astype(o_ref.dtype)


# ------------------------------- wrapper -------------------------------------

def _choose_block_b(B, S, D, H, budget_bytes=24 << 20):
    """Largest divisor of B whose per-step VMEM footprint fits the budget,
    then shrunk (if needed) so the grid has >= 2 steps for v7x megacore."""
    def est_bytes(Bt):
        N = Bt * S
        io = 2 * (2 * N * D * 2) + 2 * (Bt * S * S * 2) + 2 * (N * D * 4)  # x,y,mask,out (dbl-buf)
        w = 2 * (4 * D * D * 2 + 3 * D * 4)                                 # weights + biases (dbl-buf)
        inter = 2 * H * Bt * S * S * 4 + 10 * N * D * 4                     # scores+p, proj temps (coarse)
        return io + w + inter

    best = 1
    for bt in range(1, B + 1):
        if B % bt == 0 and est_bytes(bt) <= budget_bytes:
            best = bt
    if B >= 2 and B // best < 2:          # keep >= 2 grid steps (v7x megacore)
        for bt in range(best - 1, 0, -1):
            if B % bt == 0 and B // bt >= 2:
                best = bt
                break
    return best, est_bytes(best)


def multihead_cross_attention_pallas(x, y, mask, params, num_heads, block_b=None):
    """x, y: (B, S, D) f32; mask: (B, S, S) additive f32. Returns (B, S, D) f32."""
    B, S, D = x.shape
    H = num_heads
    hd = D // H
    assert H * hd == D

    w_kv, b_kv = params["w_kv"], params["b_kv"]   # (D, 2D), (2D,)
    w_q, b_q = params["w_q"], params["b_q"]       # (D, D),  (D,)
    w_o, b_o = params["w_o"], params["b_o"]       # (D, D),  (D,)

    # ---- host-side weight prep ----
    scale = 1.0 / math.sqrt(hd)
    wq_cat = (w_q * scale).astype(jnp.bfloat16)                       # (D, D)
    bq_cat = (b_q * scale).reshape(1, D).astype(jnp.float32)

    kv4 = w_kv.reshape(D, H, 2, hd)          # PyTorch per-head [k_h | v_h] interleave
    wkv_cat = jnp.concatenate(
        [kv4[:, :, 0, :].reshape(D, D), kv4[:, :, 1, :].reshape(D, D)],
        axis=-1).astype(jnp.bfloat16)                                  # (D, 2D) = [K | V]
    bkv3 = b_kv.reshape(H, 2, hd)
    bkv_cat = jnp.concatenate(
        [bkv3[:, 0, :].reshape(D), bkv3[:, 1, :].reshape(D)]
    ).reshape(1, 2 * D).astype(jnp.float32)

    wo_b = w_o.astype(jnp.bfloat16)                                    # (D, D) original layout
    bo_b = b_o.reshape(1, D).astype(jnp.float32)

    x_b = x.astype(jnp.bfloat16)
    y_b = y.astype(jnp.bfloat16)
    mask_b = mask.astype(jnp.bfloat16)   # additive mask; 0 / -1e9 survive bf16

    # ---- batch blocking from a VMEM byte budget ----
    if block_b is None:
        block_b, est = _choose_block_b(B, S, D, H)
    else:
        assert B % block_b == 0
        _, est = block_b, _choose_block_b(B, S, D, H)[1]
    Bt = block_b
    grid = (B // Bt,)
    vmem_limit = int(min(48 << 20, max(32 << 20, 2 * est)))

    kernel = functools.partial(mhca_kernel, H)

    def const2(shape):
        return pl.BlockSpec(shape, lambda b: (0, 0))

    return pl.pallas_call(
        kernel,
        out_shape=jax.ShapeDtypeStruct((B, S, D), jnp.float32),
        grid=grid,
        in_specs=[
            pl.BlockSpec((Bt, S, D), lambda b: (b, 0, 0)),   # x (keys/values)
            pl.BlockSpec((Bt, S, D), lambda b: (b, 0, 0)),   # y (queries)
            pl.BlockSpec((Bt, S, S), lambda b: (b, 0, 0)),   # additive mask (bf16)
            const2((D, D)), const2((1, D)),                  # Wq (pre-scaled), bq
            const2((D, 2 * D)), const2((1, 2 * D)),          # Wkv [K | V], bkv
            const2((D, D)), const2((1, D)),                  # Wo (original layout), bo
        ],
        out_specs=pl.BlockSpec((Bt, S, D), lambda b: (b, 0, 0)),
        compiler_params=pltpu.CompilerParams(
            dimension_semantics=("parallel",),
            vmem_limit_bytes=vmem_limit),
    )(x_b, y_b, mask_b, wq_cat, bq_cat, wkv_cat, bkv_cat, wo_b, bo_b)


# ----------------------- pure-JAX reference (PyTorch semantics) --------------

def mhca_ref(x, y, mask, params, num_heads):
    B, S, D = x.shape
    hd = D // num_heads
    kv = x @ params["w_kv"] + params["b_kv"]                 # (B, S, 2D)
    q = y @ params["w_q"] + params["b_q"]                    # (B, S, D)
    kv = kv.reshape(B, S, num_heads, 2 * hd).transpose(0, 2, 1, 3)
    q = q.reshape(B, S, num_heads, hd).transpose(0, 2, 1, 3)
    k, v = jnp.split(kv, 2, axis=-1)
    scaled = jnp.einsum("bhqd,bhkd->bhqk", q, k) / math.sqrt(hd)
    scaled = scaled + mask[:, None, :, :]                    # == permute trick
    attn = jax.nn.softmax(scaled, axis=-1)
    vals = jnp.einsum("bhqk,bhkd->bhqd", attn, v)
    vals = vals.transpose(0, 2, 1, 3).reshape(B, S, D)
    return vals @ params["w_o"] + params["b_o"]


# --------------------------------- main --------------------------------------

if __name__ == "__main__":
    B, S, D, H = 2, 8, 32, 4

    key = jax.random.PRNGKey(0)
    kx, ky, k1, k2, k3, k4, k5, k6 = jax.random.split(key, 8)

    params = dict(
        w_kv=jax.random.normal(k1, (D, 2 * D), jnp.float32) / math.sqrt(D),
        b_kv=0.02 * jax.random.normal(k2, (2 * D,), jnp.float32),
        w_q=jax.random.normal(k3, (D, D), jnp.float32) / math.sqrt(D),
        b_q=0.02 * jax.random.normal(k4, (D,), jnp.float32),
        w_o=jax.random.normal(k5, (D, D), jnp.float32) / math.sqrt(D),
        b_o=0.02 * jax.random.normal(k6, (D,), jnp.float32),
    )

    x = jax.random.normal(kx, (B, S, D), jnp.float32)   # keys / values input
    y = jax.random.normal(ky, (B, S, D), jnp.float32)   # queries input

    # Additive key-padding mask (B, S, S): batch 0 fully visible, batch 1 masks
    # its last 3 keys. Every query row keeps at least one unmasked key.
    lengths = jnp.array([S, S - 3], dtype=jnp.int32)
    key_valid = jnp.arange(S)[None, :] < lengths[:, None]           # (B, S)
    mask = jnp.where(key_valid[:, None, :], 0.0, -1e9).astype(jnp.float32)
    mask = jnp.broadcast_to(mask, (B, S, S))

    out = multihead_cross_attention_pallas(x, y, mask, params, H)
    out = jax.block_until_ready(out)

    ref = jax.block_until_ready(mhca_ref(x, y, mask, params, H))

    assert out.shape == (B, S, D)
    # bf16 activations/weights + approx-reciprocal softmax vs f32 reference:
    # intentional precision trade-off -> loose tolerance.
    assert np.allclose(np.asarray(out), np.asarray(ref), atol=1e-1, rtol=5e-2)

    print("KERNEL_OK")
</pallas_src>

<mosaic_0001>
module attributes {stable_mosaic.version = 11 : i64} {
  func.func @mhca_kernel(%arg0: i32, %arg1: memref<1x8x32xbf16, #tpu.memory_space<vmem>>, %arg2: memref<1x8x32xbf16, #tpu.memory_space<vmem>>, %arg3: memref<1x8x8xbf16, #tpu.memory_space<vmem>>, %arg4: memref<32x32xbf16, #tpu.memory_space<vmem>>, %arg5: memref<1x32xf32, #tpu.memory_space<vmem>>, %arg6: memref<32x64xbf16, #tpu.memory_space<vmem>>, %arg7: memref<1x64xf32, #tpu.memory_space<vmem>>, %arg8: memref<32x32xbf16, #tpu.memory_space<vmem>>, %arg9: memref<1x32xf32, #tpu.memory_space<vmem>>, %arg10: memref<1x8x32xf32, #tpu.memory_space<vmem>>) attributes {dimension_semantics = [#tpu.dimension_semantics<parallel>], iteration_bounds = array<i64: 2>, scalar_prefetch = 0 : i64, scratch_operands = 0 : i64, tpu.core_type = #tpu.core_type<tc>, window_params = [{transform_indices = @transform_0, window_bounds = array<i64: 1, 8, 32>}, {transform_indices = @transform_1, window_bounds = array<i64: 1, 8, 32>}, {transform_indices = @transform_2, window_bounds = array<i64: 1, 8, 8>}, {pipeline_mode = #tpu.pipeline_mode<synchronous>, transform_indices = @transform_3, window_bounds = array<i64: 32, 32>}, {pipeline_mode = #tpu.pipeline_mode<synchronous>, transform_indices = @transform_4, window_bounds = array<i64: 1, 32>}, {pipeline_mode = #tpu.pipeline_mode<synchronous>, transform_indices = @transform_5, window_bounds = array<i64: 32, 64>}, {pipeline_mode = #tpu.pipeline_mode<synchronous>, transform_indices = @transform_6, window_bounds = array<i64: 1, 64>}, {pipeline_mode = #tpu.pipeline_mode<synchronous>, transform_indices = @transform_7, window_bounds = array<i64: 32, 32>}, {pipeline_mode = #tpu.pipeline_mode<synchronous>, transform_indices = @transform_8, window_bounds = array<i64: 1, 32>}, {transform_indices = @transform_9, window_bounds = array<i64: 1, 8, 32>}]} {
    %c0 = arith.constant 0 : index
    %c0_0 = arith.constant 0 : index
    %c0_1 = arith.constant 0 : index
    %0 = vector.load %arg1[%c0, %c0_0, %c0_1] : memref<1x8x32xbf16, #tpu.memory_space<vmem>>, vector<1x8x32xbf16>
    %1 = vector.shape_cast %0 : vector<1x8x32xbf16> to vector<8x32xbf16>
    %c0_2 = arith.constant 0 : index
    %c0_3 = arith.constant 0 : index
    %c0_4 = arith.constant 0 : index
    %2 = vector.load %arg2[%c0_2, %c0_3, %c0_4] : memref<1x8x32xbf16, #tpu.memory_space<vmem>>, vector<1x8x32xbf16>
    %3 = vector.shape_cast %2 : vector<1x8x32xbf16> to vector<8x32xbf16>
    %c0_5 = arith.constant 0 : index
    %c0_6 = arith.constant 0 : index
    %4 = vector.load %arg6[%c0_5, %c0_6] : memref<32x64xbf16, #tpu.memory_space<vmem>>, vector<32x64xbf16>
    %cst = arith.constant dense<0.000000e+00> : vector<8x64xf32>
    %5 = tpu.matmul %1, %4, %cst {dimension_numbers = #tpu.dot_dimension_numbers<[1], [0], [0], [1], [0, 0, 1, 1], [], []>} : vector<8x32xbf16>, vector<32x64xbf16>, vector<8x64xf32> -> vector<8x64xf32>
    %c0_7 = arith.constant 0 : index
    %c0_8 = arith.constant 0 : index
    %6 = vector.load %arg7[%c0_7, %c0_8] : memref<1x64xf32, #tpu.memory_space<vmem>>, vector<1x64xf32>
    %7 = vector.broadcast %6 : vector<1x64xf32> to vector<8x64xf32>
    %8 = arith.addf %5, %7 : vector<8x64xf32>
    %9 = arith.truncf %8 : vector<8x64xf32> to vector<8x64xbf16>
    %c0_9 = arith.constant 0 : index
    %c0_10 = arith.constant 0 : index
    %10 = vector.load %arg4[%c0_9, %c0_10] : memref<32x32xbf16, #tpu.memory_space<vmem>>, vector<32x32xbf16>
    %cst_11 = arith.constant dense<0.000000e+00> : vector<8x32xf32>
    %11 = tpu.matmul %3, %10, %cst_11 {dimension_numbers = #tpu.dot_dimension_numbers<[1], [0], [0], [1], [0, 0, 1, 1], [], []>} : vector<8x32xbf16>, vector<32x32xbf16>, vector<8x32xf32> -> vector<8x32xf32>
    %c0_12 = arith.constant 0 : index
    %c0_13 = arith.constant 0 : index
    %12 = vector.load %arg5[%c0_12, %c0_13] : memref<1x32xf32, #tpu.memory_space<vmem>>, vector<1x32xf32>
    %13 = vector.broadcast %12 : vector<1x32xf32> to vector<8x32xf32>
    %14 = arith.addf %11, %13 : vector<8x32xf32>
    %15 = arith.truncf %14 : vector<8x32xf32> to vector<8x32xbf16>
    %16 = vector.extract_strided_slice %9 {offsets = [0, 0], sizes = [8, 32], strides = [1, 1]} : vector<8x64xbf16> to vector<8x32xbf16>
    %17 = vector.extract_strided_slice %9 {offsets = [0, 32], sizes = [8, 32], strides = [1, 1]} : vector<8x64xbf16> to vector<8x32xbf16>
    %18 = vector.extract_strided_slice %15 {offsets = [0, 0], sizes = [8, 8], strides = [1, 1]} : vector<8x32xbf16> to vector<8x8xbf16>
    %19 = vector.extract_strided_slice %15 {offsets = [0, 8], sizes = [8, 8], strides = [1, 1]} : vector<8x32xbf16> to vector<8x8xbf16>
    %20 = vector.extract_strided_slice %15 {offsets = [0, 16], sizes = [8, 8], strides = [1, 1]} : vector<8x32xbf16> to vector<8x8xbf16>
    %21 = vector.extract_strided_slice %15 {offsets = [0, 24], sizes = [8, 8], strides = [1, 1]} : vector<8x32xbf16> to vector<8x8xbf16>
    %22 = vector.shape_cast %18 : vector<8x8xbf16> to vector<1x8x8xbf16>
    %23 = vector.shape_cast %19 : vector<8x8xbf16> to vector<1x8x8xbf16>
    %24 = vector.shape_cast %20 : vector<8x8xbf16> to vector<1x8x8xbf16>
    %25 = vector.shape_cast %21 : vector<8x8xbf16> to vector<1x8x8xbf16>
    %26 = tpu.concatenate %22, %23, %24, %25 in 0 : vector<1x8x8xbf16>, vector<1x8x8xbf16>, vector<1x8x8xbf16>, vector<1x8x8xbf16> -> vector<4x8x8xbf16>
    %27 = vector.extract_strided_slice %16 {offsets = [0, 0], sizes = [8, 8], strides = [1, 1]} : vector<8x32xbf16> to vector<8x8xbf16>
    %28 = vector.extract_strided_slice %16 {offsets = [0, 8], sizes = [8, 8], strides = [1, 1]} : vector<8x32xbf16> to vector<8x8xbf16>
    %29 = vector.extract_strided_slice %16 {offsets = [0, 16], sizes = [8, 8], strides = [1, 1]} : vector<8x32xbf16> to vector<8x8xbf16>
    %30 = vector.extract_strided_slice %16 {offsets = [0, 24], sizes = [8, 8], strides = [1, 1]} : vector<8x32xbf16> to vector<8x8xbf16>
    %31 = vector.shape_cast %27 : vector<8x8xbf16> to vector<1x8x8xbf16>
    %32 = vector.shape_cast %28 : vector<8x8xbf16> to vector<1x8x8xbf16>
    %33 = vector.shape_cast %29 : vector<8x8xbf16> to vector<1x8x8xbf16>
    %34 = vector.shape_cast %30 : vector<8x8xbf16> to vector<1x8x8xbf16>
    %35 = tpu.concatenate %31, %32, %33, %34 in 0 : vector<1x8x8xbf16>, vector<1x8x8xbf16>, vector<1x8x8xbf16>, vector<1x8x8xbf16> -> vector<4x8x8xbf16>
    %36 = vector.extract_strided_slice %17 {offsets = [0, 0], sizes = [8, 8], strides = [1, 1]} : vector<8x32xbf16> to vector<8x8xbf16>
    %37 = vector.extract_strided_slice %17 {offsets = [0, 8], sizes = [8, 8], strides = [1, 1]} : vector<8x32xbf16> to vector<8x8xbf16>
    %38 = vector.extract_strided_slice %17 {offsets = [0, 16], sizes = [8, 8], strides = [1, 1]} : vector<8x32xbf16> to vector<8x8xbf16>
    %39 = vector.extract_strided_slice %17 {offsets = [0, 24], sizes = [8, 8], strides = [1, 1]} : vector<8x32xbf16> to vector<8x8xbf16>
    %40 = vector.shape_cast %36 : vector<8x8xbf16> to vector<1x8x8xbf16>
    %41 = vector.shape_cast %37 : vector<8x8xbf16> to vector<1x8x8xbf16>
    %42 = vector.shape_cast %38 : vector<8x8xbf16> to vector<1x8x8xbf16>
    %43 = vector.shape_cast %39 : vector<8x8xbf16> to vector<1x8x8xbf16>
    %44 = tpu.concatenate %40, %41, %42, %43 in 0 : vector<1x8x8xbf16>, vector<1x8x8xbf16>, vector<1x8x8xbf16>, vector<1x8x8xbf16> -> vector<4x8x8xbf16>
    "tpu.trace_start"() <{level = 10 : i32, message = "gqe,gke->gqk"}> : () -> ()
    %cst_14 = arith.constant dense<0.000000e+00> : vector<4x8x8xf32>
    %45 = tpu.matmul %26, %35, %cst_14 {dimension_numbers = #tpu.dot_dimension_numbers<[2], [2], [1], [1], [0, 0, 0, 1, 1, 1], [0], [0]>} : vector<4x8x8xbf16>, vector<4x8x8xbf16>, vector<4x8x8xf32> -> vector<4x8x8xf32>
    "tpu.trace_stop"() : () -> ()
    %46 = vector.shape_cast %45 : vector<4x8x8xf32> to vector<4x1x8x8xf32>
    %c0_15 = arith.constant 0 : index
    %c0_16 = arith.constant 0 : index
    %c0_17 = arith.constant 0 : index
    %47 = vector.load %arg3[%c0_15, %c0_16, %c0_17] : memref<1x8x8xbf16, #tpu.memory_space<vmem>>, vector<1x8x8xbf16>
    %48 = vector.shape_cast %47 : vector<1x8x8xbf16> to vector<1x1x8x8xbf16>
    %49 = arith.extf %48 : vector<1x1x8x8xbf16> to vector<1x1x8x8xf32>
    %50 = vector.broadcast %49 : vector<1x1x8x8xf32> to vector<4x1x8x8xf32>
    %51 = arith.addf %46, %50 : vector<4x1x8x8xf32>
    %52 = vector.shape_cast %51 : vector<4x1x8x8xf32> to vector<4x8x8xf32>
    %cst_18 = arith.constant dense<0xFF800000> : vector<4x8xf32>
    %53 = vector.multi_reduction <maximumf>, %52, %cst_18 [2] : vector<4x8x8xf32> to vector<4x8xf32>
    %54 = vector.shape_cast %53 : vector<4x8xf32> to vector<4x8x1xf32>
    %55 = vector.broadcast %54 : vector<4x8x1xf32> to vector<4x8x8xf32>
    %56 = arith.subf %52, %55 : vector<4x8x8xf32>
    %57 = math.exp %56 : vector<4x8x8xf32>
    %cst_19 = arith.constant dense<0.000000e+00> : vector<4x8xf32>
    %58 = vector.multi_reduction <add>, %57, %cst_19 [2] : vector<4x8x8xf32> to vector<4x8xf32>
    %59 = vector.shape_cast %58 : vector<4x8xf32> to vector<4x8x1xf32>
    %60 = tpu.reciprocal %59 {approx = true} : vector<4x8x1xf32> -> vector<4x8x1xf32>
    %61 = vector.broadcast %60 : vector<4x8x1xf32> to vector<4x8x8xf32>
    %62 = arith.mulf %57, %61 : vector<4x8x8xf32>
    %63 = arith.truncf %62 : vector<4x8x8xf32> to vector<4x8x8xbf16>
    "tpu.trace_start"() <{level = 10 : i32, message = "gqk,gke->gqe"}> : () -> ()
    %cst_20 = arith.constant dense<0.000000e+00> : vector<4x8x8xf32>
    %64 = tpu.matmul %63, %44, %cst_20 {dimension_numbers = #tpu.dot_dimension_numbers<[2], [1], [1], [2], [0, 0, 0, 1, 1, 2], [0], [0]>} : vector<4x8x8xbf16>, vector<4x8x8xbf16>, vector<4x8x8xf32> -> vector<4x8x8xf32>
    "tpu.trace_stop"() : () -> ()
    %65 = vector.extract_strided_slice %64 {offsets = [0, 0, 0], sizes = [1, 8, 8], strides = [1, 1, 1]} : vector<4x8x8xf32> to vector<1x8x8xf32>
    %66 = vector.shape_cast %65 : vector<1x8x8xf32> to vector<8x8xf32>
    %67 = arith.truncf %66 : vector<8x8xf32> to vector<8x8xbf16>
    %68 = vector.extract_strided_slice %64 {offsets = [1, 0, 0], sizes = [1, 8, 8], strides = [1, 1, 1]} : vector<4x8x8xf32> to vector<1x8x8xf32>
    %69 = vector.shape_cast %68 : vector<1x8x8xf32> to vector<8x8xf32>
    %70 = arith.truncf %69 : vector<8x8xf32> to vector<8x8xbf16>
    %71 = vector.extract_strided_slice %64 {offsets = [2, 0, 0], sizes = [1, 8, 8], strides = [1, 1, 1]} : vector<4x8x8xf32> to vector<1x8x8xf32>
    %72 = vector.shape_cast %71 : vector<1x8x8xf32> to vector<8x8xf32>
    %73 = arith.truncf %72 : vector<8x8xf32> to vector<8x8xbf16>
    %74 = vector.extract_strided_slice %64 {offsets = [3, 0, 0], sizes = [1, 8, 8], strides = [1, 1, 1]} : vector<4x8x8xf32> to vector<1x8x8xf32>
    %75 = vector.shape_cast %74 : vector<1x8x8xf32> to vector<8x8xf32>
    %76 = arith.truncf %75 : vector<8x8xf32> to vector<8x8xbf16>
    %77 = tpu.concatenate %67, %70, %73, %76 in 1 : vector<8x8xbf16>, vector<8x8xbf16>, vector<8x8xbf16>, vector<8x8xbf16> -> vector<8x32xbf16>
    %c0_21 = arith.constant 0 : index
    %c0_22 = arith.constant 0 : index
    %78 = vector.load %arg8[%c0_21, %c0_22] : memref<32x32xbf16, #tpu.memory_space<vmem>>, vector<32x32xbf16>
    %cst_23 = arith.constant dense<0.000000e+00> : vector<8x32xf32>
    %79 = tpu.matmul %77, %78, %cst_23 {dimension_numbers = #tpu.dot_dimension_numbers<[1], [0], [0], [1], [0, 0, 1, 1], [], []>} : vector<8x32xbf16>, vector<32x32xbf16>, vector<8x32xf32> -> vector<8x32xf32>
    %c0_24 = arith.constant 0 : index
    %c0_25 = arith.constant 0 : index
    %80 = vector.load %arg9[%c0_24, %c0_25] : memref<1x32xf32, #tpu.memory_space<vmem>>, vector<1x32xf32>
    %81 = vector.broadcast %80 : vector<1x32xf32> to vector<8x32xf32>
    %82 = arith.addf %79, %81 : vector<8x32xf32>
    %83 = vector.shape_cast %82 : vector<8x32xf32> to vector<1x8x32xf32>
    %c0_26 = arith.constant 0 : index
    %c0_27 = arith.constant 0 : index
    %c0_28 = arith.constant 0 : index
    %84 = vector.load %arg10[%c0_26, %c0_27, %c0_28] : memref<1x8x32xf32, #tpu.memory_space<vmem>>, vector<1x8x32xf32>
    tpu.vector_store %arg10[%c0_26, %c0_27, %c0_28], %83 {strides = array<i32>} : memref<1x8x32xf32, #tpu.memory_space<vmem>>, vector<1x8x32xf32>,
    return
  }
  func.func @transform_0(%arg0: i32) -> (i32, i32, i32) {
    %c0_i32 = arith.constant 0 : i32
    %c0_i32_0 = arith.constant 0 : i32
    %c0_i32_1 = arith.constant 0 : i32
    return %arg0, %c0_i32, %c0_i32_0 : i32, i32, i32
  }
  func.func @transform_1(%arg0: i32) -> (i32, i32, i32) {
    %c0_i32 = arith.constant 0 : i32
    %c0_i32_0 = arith.constant 0 : i32
    %c0_i32_1 = arith.constant 0 : i32
    return %arg0, %c0_i32, %c0_i32_0 : i32, i32, i32
  }
  func.func @transform_2(%arg0: i32) -> (i32, i32, i32) {
    %c0_i32 = arith.constant 0 : i32
    %c0_i32_0 = arith.constant 0 : i32
    %c0_i32_1 = arith.constant 0 : i32
    return %arg0, %c0_i32, %c0_i32_0 : i32, i32, i32
  }
  func.func @transform_3(%arg0: i32) -> (i32, i32) {
    %c0_i32 = arith.constant 0 : i32
    %c0_i32_0 = arith.constant 0 : i32
    %c0_i32_1 = arith.constant 0 : i32
    return %c0_i32, %c0_i32_0 : i32, i32
  }
  func.func @transform_4(%arg0: i32) -> (i32, i32) {
    %c0_i32 = arith.constant 0 : i32
    %c0_i32_0 = arith.constant 0 : i32
    %c0_i32_1 = arith.constant 0 : i32
    return %c0_i32, %c0_i32_0 : i32, i32
  }
  func.func @transform_5(%arg0: i32) -> (i32, i32) {
    %c0_i32 = arith.constant 0 : i32
    %c0_i32_0 = arith.constant 0 : i32
    %c0_i32_1 = arith.constant 0 : i32
    return %c0_i32, %c0_i32_0 : i32, i32
  }
  func.func @transform_6(%arg0: i32) -> (i32, i32) {
    %c0_i32 = arith.constant 0 : i32
    %c0_i32_0 = arith.constant 0 : i32
    %c0_i32_1 = arith.constant 0 : i32
    return %c0_i32, %c0_i32_0 : i32, i32
  }
  func.func @transform_7(%arg0: i32) -> (i32, i32) {
    %c0_i32 = arith.constant 0 : i32
    %c0_i32_0 = arith.constant 0 : i32
    %c0_i32_1 = arith.constant 0 : i32
    return %c0_i32, %c0_i32_0 : i32, i32
  }
  func.func @transform_8(%arg0: i32) -> (i32, i32) {
    %c0_i32 = arith.constant 0 : i32
    %c0_i32_0 = arith.constant 0 : i32
    %c0_i32_1 = arith.constant 0 : i32
    return %c0_i32, %c0_i32_0 : i32, i32
  }
  func.func @transform_9(%arg0: i32) -> (i32, i32, i32) {
    %c0_i32 = arith.constant 0 : i32
    %c0_i32_0 = arith.constant 0 : i32
    %c0_i32_1 = arith.constant 0 : i32
    return %arg0, %c0_i32, %c0_i32_0 : i32, i32, i32
  }
}

</mosaic_0001>

<llo_original>
// kernel: tpu_custom_call.1
$region0: #{tpu_custom_call.1}
  #allocation0 [shape = 'u32[]', space=smem, size = 0x4, offset = 0x4, fixed_abs, tag = 'smem constant byte address 0x4 - core index']
  #allocation1 [shape = 'u32[144,128]{1,0:T(1,128)}', space=vmem, size = 0x12000, scoped, tag = 'internal scratch']
  %s0 = inlined_call_operand.hbm [shape: bf16[2,8,32], index: 0, kind: input, shape index: {}]
  %s1 = inlined_call_operand.hbm [shape: bf16[2,8,32], index: 1, kind: input, shape index: {}]
  %s2 = inlined_call_operand.hbm [shape: bf16[2,8,8], index: 2, kind: input, shape index: {}]
  %s3 = inlined_call_operand.hbm [shape: bf16[32,32], index: 3, kind: input, shape index: {}]
  %s4 = inlined_call_operand.vmem [shape: f32[1,32], index: 4, kind: input, shape index: {}]
  %s5 = inlined_call_operand.vmem [shape: bf16[32,64], index: 5, kind: input, shape index: {}]
  %s6 = inlined_call_operand.vmem [shape: f32[1,64], index: 6, kind: input, shape index: {}]
  %s7 = inlined_call_operand.hbm [shape: bf16[32,32], index: 7, kind: input, shape index: {}]
  %s8 = inlined_call_operand.vmem [shape: f32[1,32], index: 8, kind: input, shape index: {}]
  %s9 = inlined_call_operand.hbm [shape: f32[2,8,32], index: 9, kind: output, shape index: {}]
  %s10 = sld [smem:[#allocation0]]
  $region89: #{tpu_custom_call.1} parent=0
    _
  %s12 = ssub.s32 1, %s10
  %s13 = scalar_select 0, %s12, %s10
  $region1: #{tpu_custom_call.1} parent=0
    #allocation2 [shape = 'u8[4096]{0}', space=vmem, size = 0x1000, scoped, tag = 'input window, operand 0']
    #allocation3 [shape = 's32[2]{0}', space=sflag, size = 0x8, scoped, tag = 'scoped memory for tpu_custom_call.1']
    #allocation4 [shape = 's32[2]{0}', space=sflag, size = 0x8, scoped, tag = 'scoped memory for tpu_custom_call.1']
    #allocation5 [shape = 'u8[4096]{0}', space=vmem, size = 0x1000, scoped, tag = 'input window, operand 1']
    #allocation6 [shape = 's32[2]{0}', space=sflag, size = 0x8, scoped, tag = 'scoped memory for tpu_custom_call.1']
    #allocation7 [shape = 'u8[4096]{0}', space=vmem, size = 0x1000, scoped, tag = 'input window, operand 2']
    #allocation8 [shape = 'u8[8192]{0}', space=vmem, size = 0x2000, scoped, tag = 'input window, operand 3, single buffered']
    #allocation9 [shape = 's32[1]{0}', space=sflag, size = 0x4, scoped, tag = 'scoped memory for tpu_custom_call.1']
    #allocation10 [shape = 'u8[8192]{0}', space=vmem, size = 0x2000, scoped, tag = 'input window, operand 7, single buffered']
    #allocation11 [shape = 'u8[8192]{0}', space=vmem, size = 0x2000, scoped, tag = 'output window, operand 0']
    %14 = vsyncpa [#allocation3], 0
    %s15 = scalar_lea.sflag [#allocation3], 1
    %16 = vsyncpa %s15, 0
    %17 = vsyncpa [#allocation6], 0
    %s18 = scalar_lea.sflag [#allocation6], 1
    %19 = vsyncpa %s18, 0
    %20 = vsyncpa [#allocation9], 0
    %21 = vsyncpa [#allocation4], 0
    %s22 = scalar_lea.sflag [#allocation4], 1
    %23 = vsyncpa %s22, 0
    loop: start=0, step=1, limit=4
    $region2: #{tpu_custom_call.1} parent=1 // loop_pre_header
      _
    $region3: #{tpu_custom_call.1} parent=1 // loop_header
      %s25 = sphi 0, %s29
      %p26 = scmp.ge.s32.totalorder %s25, 4
      %s35 = sphi 0, %s37
      %s38 = sphi 0, %s35
      %s39 = sphi 0, %s38
      %s55 = sphi 0, %s39
      %s61 = sphi 0, %s63
      %s64 = sphi 0, %s61
      %s65 = sphi 0, %s64
      %s81 = sphi 0, %s65
      %s87 = sphi 0, %s89
      %s90 = sphi 0, %s87
      %s91 = sphi 0, %s90
      %s107 = sphi 0, %s91
      %s111 = sphi 0, %s111
      %s113 = sphi 0, %s111
      %s114 = sphi 0, %s113
      %s128 = sphi 0, %s114
      %s132 = sphi 0, %s132
      %s134 = sphi 0, %s132
      %s135 = sphi 0, %s134
      %s149 = sphi 0, %s135
      %s153 = sphi 0, %s153
      %s155 = sphi 0, %s153
      %s156 = sphi 0, %s155
      %s170 = sphi 0, %s156
      %s174 = sphi 0, %s174
      %s176 = sphi 0, %s174
      %s177 = sphi 0, %s176
      %s191 = sphi 0, %s177
      %s195 = sphi 0, %s195
      %s197 = sphi 0, %s195
      %s198 = sphi 0, %s197
      %s212 = sphi 0, %s198
      %s216 = sphi 0, %s216
      %s218 = sphi 0, %s216
      %s219 = sphi 0, %s218
      %s233 = sphi 0, %s219
      %s239 = sphi 0, %s241
      %s242 = sphi 0, %s239
      %s243 = sphi 0, %s242
      %s259 = sphi 0, %s243
    $region4: #{tpu_custom_call.1} parent=1 // loop_header_branch
      %28 = sbr.rel (%p26) target = $region8
    $region5: #{tpu_custom_call.1} parent=1 // loop_body
      %s30 = ssub.s32 %s25, 1
      %s31 = ssub.s32 %s25, 2
      %s32 = sadd.s32 %s25, 1
      %s33 = ssub.s32 %s25, %s32
      %p34 = scmp.eq.s32.totalorder %s33, 0
      %s36 = sadd.s32 %s35, 1
      %s37 = scalar_select %p34, %s35, %s36
      %p40 = pneg %p34
      %p41 = scmp.eq.s32.totalorder %s25, 1
      %p42 = por %p40, %p41
      %p43 = scmp.ne.s32.totalorder %s35, %s38
      %p44 = scmp.eq.s32.totalorder %s25, 0
      %p45 = por %p43, %p44
      %p46 = scmp.ne.s32.totalorder %s35, %s38
      %p47 = scmp.eq.s32.totalorder %s30, 1
      %p48 = por %p46, %p47
      %p49 = scmp.ne.s32.totalorder %s38, %s39
      %p50 = scmp.eq.s32.totalorder %s30, 0
      %p51 = por %p49, %p50
      %p52 = scmp.ne.s32.totalorder %s38, %s39
      %p53 = scmp.eq.s32.totalorder %s31, 1
      %p54 = por %p52, %p53
      %p56 = scmp.ne.s32.totalorder %s39, %s55
      %p57 = scmp.eq.s32.totalorder %s31, 0
      %p58 = por %p56, %p57
      %s59 = ssub.s32 %s25, %s32
      %p60 = scmp.eq.s32.totalorder %s59, 0
      %s62 = sadd.s32 %s61, 1
      %s63 = scalar_select %p60, %s61, %s62
      %p66 = pneg %p60
      %p67 = scmp.eq.s32.totalorder %s25, 1
      %p68 = por %p66, %p67
      %p69 = scmp.ne.s32.totalorder %s61, %s64
      %p70 = scmp.eq.s32.totalorder %s25, 0
      %p71 = por %p69, %p70
      %p72 = scmp.ne.s32.totalorder %s61, %s64
      %p73 = scmp.eq.s32.totalorder %s30, 1
      %p74 = por %p72, %p73
      %p75 = scmp.ne.s32.totalorder %s64, %s65
      %p76 = scmp.eq.s32.totalorder %s30, 0
      %p77 = por %p75, %p76
      %p78 = scmp.ne.s32.totalorder %s64, %s65
      %p79 = scmp.eq.s32.totalorder %s31, 1
      %p80 = por %p78, %p79
      %p82 = scmp.ne.s32.totalorder %s65, %s81
      %p83 = scmp.eq.s32.totalorder %s31, 0
      %p84 = por %p82, %p83
      %s85 = ssub.s32 %s25, %s32
      %p86 = scmp.eq.s32.totalorder %s85, 0
      %s88 = sadd.s32 %s87, 1
      %s89 = scalar_select %p86, %s87, %s88
      %p92 = pneg %p86
      %p93 = scmp.eq.s32.totalorder %s25, 1
      %p94 = por %p92, %p93
      %p95 = scmp.ne.s32.totalorder %s87, %s90
      %p96 = scmp.eq.s32.totalorder %s25, 0
      %p97 = por %p95, %p96
      %p98 = scmp.ne.s32.totalorder %s87, %s90
      %p99 = scmp.eq.s32.totalorder %s30, 1
      %p100 = por %p98, %p99
      %p101 = scmp.ne.s32.totalorder %s90, %s91
      %p102 = scmp.eq.s32.totalorder %s30, 0
      %p103 = por %p101, %p102
      %p104 = scmp.ne.s32.totalorder %s90, %s91
      %p105 = scmp.eq.s32.totalorder %s31, 1
      %p106 = por %p104, %p105
      %p108 = scmp.ne.s32.totalorder %s91, %s107
      %p109 = scmp.eq.s32.totalorder %s31, 0
      %p110 = por %p108, %p109
      %s112 = sadd.s32 %s111, 1
      %p115 = scmp.eq.s32.totalorder %s25, 1
      %p116 = scmp.ne.s32.totalorder %s111, %s113
      %p117 = scmp.eq.s32.totalorder %s25, 0
      %p118 = por %p116, %p117
      %p119 = scmp.ne.s32.totalorder %s111, %s113
      %p120 = scmp.eq.s32.totalorder %s30, 1
      %p121 = por %p119, %p120
      %p122 = scmp.ne.s32.totalorder %s113, %s114
      %p123 = scmp.eq.s32.totalorder %s30, 0
      %p124 = por %p122, %p123
      %p125 = scmp.ne.s32.totalorder %s113, %s114
      %p126 = scmp.eq.s32.totalorder %s31, 1
      %p127 = por %p125, %p126
      %p129 = scmp.ne.s32.totalorder %s114, %s128
      %p130 = scmp.eq.s32.totalorder %s31, 0
      %p131 = por %p129, %p130
      %s133 = sadd.s32 %s132, 1
      %p136 = scmp.eq.s32.totalorder %s25, 1
      %p137 = scmp.ne.s32.totalorder %s132, %s134
      %p138 = scmp.eq.s32.totalorder %s25, 0
      %p139 = por %p137, %p138
      %p140 = scmp.ne.s32.totalorder %s132, %s134
      %p141 = scmp.eq.s32.totalorder %s30, 1
      %p142 = por %p140, %p141
      %p143 = scmp.ne.s32.totalorder %s134, %s135
      %p144 = scmp.eq.s32.totalorder %s30, 0
      %p145 = por %p143, %p144
      %p146 = scmp.ne.s32.totalorder %s134, %s135
      %p147 = scmp.eq.s32.totalorder %s31, 1
      %p148 = por %p146, %p147
      %p150 = scmp.ne.s32.totalorder %s135, %s149
      %p151 = scmp.eq.s32.totalorder %s31, 0
      %p152 = por %p150, %p151
      %s154 = sadd.s32 %s153, 1
      %p157 = scmp.eq.s32.totalorder %s25, 1
      %p158 = scmp.ne.s32.totalorder %s153, %s155
      %p159 = scmp.eq.s32.totalorder %s25, 0
      %p160 = por %p158, %p159
      %p161 = scmp.ne.s32.totalorder %s153, %s155
      %p162 = scmp.eq.s32.totalorder %s30, 1
      %p163 = por %p161, %p162
      %p164 = scmp.ne.s32.totalorder %s155, %s156
      %p165 = scmp.eq.s32.totalorder %s30, 0
      %p166 = por %p164, %p165
      %p167 = scmp.ne.s32.totalorder %s155, %s156
      %p168 = scmp.eq.s32.totalorder %s31, 1
      %p169 = por %p167, %p168
      %p171 = scmp.ne.s32.totalorder %s156, %s170
      %p172 = scmp.eq.s32.totalorder %s31, 0
      %p173 = por %p171, %p172
      %s175 = sadd.s32 %s174, 1
      %p178 = scmp.eq.s32.totalorder %s25, 1
      %p179 = scmp.ne.s32.totalorder %s174, %s176
      %p180 = scmp.eq.s32.totalorder %s25, 0
      %p181 = por %p179, %p180
      %p182 = scmp.ne.s32.totalorder %s174, %s176
      %p183 = scmp.eq.s32.totalorder %s30, 1
      %p184 = por %p182, %p183
      %p185 = scmp.ne.s32.totalorder %s176, %s177
      %p186 = scmp.eq.s32.totalorder %s30, 0
      %p187 = por %p185, %p186
      %p188 = scmp.ne.s32.totalorder %s176, %s177
      %p189 = scmp.eq.s32.totalorder %s31, 1
      %p190 = por %p188, %p189
      %p192 = scmp.ne.s32.totalorder %s177, %s191
      %p193 = scmp.eq.s32.totalorder %s31, 0
      %p194 = por %p192, %p193
      %s196 = sadd.s32 %s195, 1
      %p199 = scmp.eq.s32.totalorder %s25, 1
      %p200 = scmp.ne.s32.totalorder %s195, %s197
      %p201 = scmp.eq.s32.totalorder %s25, 0
      %p202 = por %p200, %p201
      %p203 = scmp.ne.s32.totalorder %s195, %s197
      %p204 = scmp.eq.s32.totalorder %s30, 1
      %p205 = por %p203, %p204
      %p206 = scmp.ne.s32.totalorder %s197, %s198
      %p207 = scmp.eq.s32.totalorder %s30, 0
      %p208 = por %p206, %p207
      %p209 = scmp.ne.s32.totalorder %s197, %s198
      %p210 = scmp.eq.s32.totalorder %s31, 1
      %p211 = por %p209, %p210
      %p213 = scmp.ne.s32.totalorder %s198, %s212
      %p214 = scmp.eq.s32.totalorder %s31, 0
      %p215 = por %p213, %p214
      %s217 = sadd.s32 %s216, 1
      %p220 = scmp.eq.s32.totalorder %s25, 1
      %p221 = scmp.ne.s32.totalorder %s216, %s218
      %p222 = scmp.eq.s32.totalorder %s25, 0
      %p223 = por %p221, %p222
      %p224 = scmp.ne.s32.totalorder %s216, %s218
      %p225 = scmp.eq.s32.totalorder %s30, 1
      %p226 = por %p224, %p225
      %p227 = scmp.ne.s32.totalorder %s218, %s219
      %p228 = scmp.eq.s32.totalorder %s30, 0
      %p229 = por %p227, %p228
      %p230 = scmp.ne.s32.totalorder %s218, %s219
      %p231 = scmp.eq.s32.totalorder %s31, 1
      %p232 = por %p230, %p231
      %p234 = scmp.ne.s32.totalorder %s219, %s233
      %p235 = scmp.eq.s32.totalorder %s31, 0
      %p236 = por %p234, %p235
      %s237 = ssub.s32 %s25, %s32
      %p238 = scmp.eq.s32.totalorder %s237, 0
      %s240 = sadd.s32 %s239, 1
      %s241 = scalar_select %p238, %s239, %s240
      %p244 = pneg %p238
      %p245 = scmp.eq.s32.totalorder %s25, 1
      %p246 = por %p244, %p245
      %p247 = scmp.ne.s32.totalorder %s239, %s242
      %p248 = scmp.eq.s32.totalorder %s25, 0
      %p249 = por %p247, %p248
      %p250 = scmp.ne.s32.totalorder %s239, %s242
      %p251 = scmp.eq.s32.totalorder %s30, 1
      %p252 = por %p250, %p251
      %p253 = scmp.ne.s32.totalorder %s242, %s243
      %p254 = scmp.eq.s32.totalorder %s30, 0
      %p255 = por %p253, %p254
      %p256 = scmp.ne.s32.totalorder %s242, %s243
      %p257 = scmp.eq.s32.totalorder %s31, 1
      %p258 = por %p256, %p257
      %p260 = scmp.ne.s32.totalorder %s243, %s259
      %p261 = scmp.eq.s32.totalorder %s31, 0
      %p262 = por %p260, %p261
      %p263 = scmp.le.s32.totalorder 1, %s25
      %p264 = scmp.lt.s32.totalorder %s25, 3
      %p265 = pnand %p263, %p264
      %p266 = pneg %p265
      // Predicated region
      $region9: #{tpu_custom_call.1} parent=5 // pred_check
        _
      $region10: #{tpu_custom_call.1} parent=5 // pred_check_branch
        %268 = sbr.rel (%p265) target = $region12
      $region11: #{tpu_custom_call.1} parent=5 // pred_region
        %s269 = ssub.s32 %s25, 1
        // Predicated region
        $region13: #{tpu_custom_call.1} parent=11 // pred_check
          %p270 = pneg %p124
        $region14: #{tpu_custom_call.1} parent=11 // pred_check_branch
          %272 = sbr.rel (%p270) target = $region16
        $region15: #{tpu_custom_call.1} parent=11 // pred_region
          %s274 = ssub.s32 256, 256
          %275 = vsyncadd [#allocation9], %s274
          %s276 = sshll.u32 [#allocation8], 4
          %s277 = int_to_ptr.vmem [resolvable:$true] %s276
          %282 = dma.hbm_to_vmem [thread:$0]  %s3, 256, %s277, [#allocation9], 64, 64, 4
        $region16: #{tpu_custom_call.1} parent=11 // pred_fallthru
          _
        // Predicated region
        $region17: #{tpu_custom_call.1} parent=11 // pred_check
          %p283 = pneg %p145
        $region18: #{tpu_custom_call.1} parent=11 // pred_check_branch
          %285 = sbr.rel (%p283) target = $region20
        $region19: #{tpu_custom_call.1} parent=11 // pred_region
          _
        $region20: #{tpu_custom_call.1} parent=11 // pred_fallthru
          _
        // Predicated region
        $region21: #{tpu_custom_call.1} parent=11 // pred_check
          %p286 = pneg %p166
        $region22: #{tpu_custom_call.1} parent=11 // pred_check_branch
          %288 = sbr.rel (%p286) target = $region24
        $region23: #{tpu_custom_call.1} parent=11 // pred_region
          _
        $region24: #{tpu_custom_call.1} parent=11 // pred_fallthru
          _
        // Predicated region
        $region25: #{tpu_custom_call.1} parent=11 // pred_check
          %p289 = pneg %p187
        $region26: #{tpu_custom_call.1} parent=11 // pred_check_branch
          %291 = sbr.rel (%p289) target = $region28
        $region27: #{tpu_custom_call.1} parent=11 // pred_region
          _
        $region28: #{tpu_custom_call.1} parent=11 // pred_fallthru
          _
        // Predicated region
        $region29: #{tpu_custom_call.1} parent=11 // pred_check
          %p292 = pneg %p208
        $region30: #{tpu_custom_call.1} parent=11 // pred_check_branch
          %294 = sbr.rel (%p292) target = $region32
        $region31: #{tpu_custom_call.1} parent=11 // pred_region
          %s296 = ssub.s32 256, 256
          %297 = vsyncadd [#allocation9], %s296
          %s298 = sshll.u32 [#allocation10], 4
          %s299 = int_to_ptr.vmem [resolvable:$true] %s298
          %304 = dma.hbm_to_vmem [thread:$0]  %s7, 256, %s299, [#allocation9], 64, 64, 4
        $region32: #{tpu_custom_call.1} parent=11 // pred_fallthru
          _
        // Predicated region
        $region33: #{tpu_custom_call.1} parent=11 // pred_check
          %p305 = pneg %p229
        $region34: #{tpu_custom_call.1} parent=11 // pred_check_branch
          %307 = sbr.rel (%p305) target = $region36
        $region35: #{tpu_custom_call.1} parent=11 // pred_region
          _
        $region36: #{tpu_custom_call.1} parent=11 // pred_fallthru
          _
      $region12: #{tpu_custom_call.1} parent=5 // pred_fallthru
        _
      %p308 = scmp.lt.s32.totalorder %s25, 2
      // Predicated region
      $region37: #{tpu_custom_call.1} parent=5 // pred_check
        %p309 = pneg %p308
      $region38: #{tpu_custom_call.1} parent=5 // pred_check_branch
        %311 = sbr.rel (%p309) target = $region40
      $region39: #{tpu_custom_call.1} parent=5 // pred_region
        // Predicated region
        $region41: #{tpu_custom_call.1} parent=39 // pred_check
          %p312 = pneg %p45
        $region42: #{tpu_custom_call.1} parent=39 // pred_check_branch
          %314 = sbr.rel (%p312) target = $region44
        $region43: #{tpu_custom_call.1} parent=39 // pred_region
          %s315 = sand.u32 %s35, 1
          %s316 = scalar_lea.sflag [#allocation3], %s315
          %s317 = sand.u32 %s35, 1
          %s318 = smul.addr %s317, 4
          %s319 = scalar_lea.vmem [#allocation2], %s318
          %s321 = ssub.s32 64, 64
          %322 = vsyncadd %s316, %s321
          %s323 = smul.addr %s25, 64
          %s324 = scalar_lea.hbm %s0, %s323
          %s326 = sshll.u32 %s319, 4
          %s327 = int_to_ptr.vmem [resolvable:$true] %s326
          %329 = dma.hbm_to_vmem [thread:$0]  %s324, 64, %s327, %s316
        $region44: #{tpu_custom_call.1} parent=39 // pred_fallthru
          _
        // Predicated region
        $region45: #{tpu_custom_call.1} parent=39 // pred_check
          %p330 = pneg %p71
        $region46: #{tpu_custom_call.1} parent=39 // pred_check_branch
          %332 = sbr.rel (%p330) target = $region48
        $region47: #{tpu_custom_call.1} parent=39 // pred_region
          %s333 = sand.u32 %s25, 1
          %s334 = scalar_lea.sflag [#allocation6], %s333
          %s335 = sand.u32 %s61, 1
          %s336 = smul.addr %s335, 4
          %s337 = scalar_lea.vmem [#allocation5], %s336
          %s339 = ssub.s32 64, 64
          %340 = vsyncadd %s334, %s339
          %s341 = smul.addr %s25, 64
          %s342 = scalar_lea.hbm %s1, %s341
          %s344 = sshll.u32 %s337, 4
          %s345 = int_to_ptr.vmem [resolvable:$true] %s344
          %347 = dma.hbm_to_vmem [thread:$0]  %s342, 64, %s345, %s334
        $region48: #{tpu_custom_call.1} parent=39 // pred_fallthru
          _
        // Predicated region
        $region49: #{tpu_custom_call.1} parent=39 // pred_check
          %p348 = pneg %p97
        $region50: #{tpu_custom_call.1} parent=39 // pred_check_branch
          %350 = sbr.rel (%p348) target = $region52
        $region51: #{tpu_custom_call.1} parent=39 // pred_region
          %s351 = sand.u32 %s25, 1
          %s352 = scalar_lea.sflag [#allocation6], %s351
          %s353 = sand.u32 %s87, 1
          %s354 = smul.addr %s353, 4
          %s355 = scalar_lea.vmem [#allocation7], %s354
          %s357 = ssub.s32 64, 64
          %358 = vsyncadd %s352, %s357
          %s359 = smul.addr %s25, 64
          %s360 = scalar_lea.hbm %s2, %s359
          %s362 = sshll.u32 %s355, 4
          %s363 = int_to_ptr.vmem [resolvable:$true] %s362
          %365 = dma.hbm_to_vmem [thread:$0]  %s360, 64, %s363, %s352
        $region52: #{tpu_custom_call.1} parent=39 // pred_fallthru
          _
      $region40: #{tpu_custom_call.1} parent=5 // pred_fallthru
        _
      %p366 = scmp.le.s32.totalorder 1, %s25
      %p367 = scmp.lt.s32.totalorder %s25, 3
      %p368 = pnand %p366, %p367
      %p369 = pneg %p368
      // Predicated region
      $region53: #{tpu_custom_call.1} parent=5 // pred_check
        _
      $region54: #{tpu_custom_call.1} parent=5 // pred_check_branch
        %371 = sbr.rel (%p368) target = $region56
      $region55: #{tpu_custom_call.1} parent=5 // pred_region
        %s372 = ssub.s32 %s25, 1
        %s373 = sand.u32 %s38, 1
        %s374 = scalar_lea.sflag [#allocation3], %s373
        %s375 = sand.u32 %s38, 1
        %s376 = smul.addr %s375, 4
        %s377 = scalar_lea.vmem [#allocation2], %s376
        // Predicated region
        $region57: #{tpu_custom_call.1} parent=55 // pred_check
          %p378 = pneg %p51
        $region58: #{tpu_custom_call.1} parent=55 // pred_check_branch
          %380 = sbr.rel (%p378) target = $region60
        $region59: #{tpu_custom_call.1} parent=55 // pred_region
          %381 = dma.done %s374, 64
        $region60: #{tpu_custom_call.1} parent=55 // pred_fallthru
          _
        %s382 = sand.u32 %s30, 1
        %s383 = scalar_lea.sflag [#allocation6], %s382
        %s384 = sand.u32 %s64, 1
        %s385 = smul.addr %s384, 4
        %s386 = scalar_lea.vmem [#allocation5], %s385
        // Predicated region
        $region61: #{tpu_custom_call.1} parent=55 // pred_check
          %p387 = pneg %p77
        $region62: #{tpu_custom_call.1} parent=55 // pred_check_branch
          %389 = sbr.rel (%p387) target = $region64
        $region63: #{tpu_custom_call.1} parent=55 // pred_region
          %390 = dma.done %s383, 64
        $region64: #{tpu_custom_call.1} parent=55 // pred_fallthru
          _
        %s391 = sand.u32 %s30, 1
        %s392 = scalar_lea.sflag [#allocation6], %s391
        %s393 = sand.u32 %s90, 1
        %s394 = smul.addr %s393, 4
        %s395 = scalar_lea.vmem [#allocation7], %s394
        // Predicated region
        $region65: #{tpu_custom_call.1} parent=55 // pred_check
          %p396 = pneg %p103
        $region66: #{tpu_custom_call.1} parent=55 // pred_check_branch
          %398 = sbr.rel (%p396) target = $region68
        $region67: #{tpu_custom_call.1} parent=55 // pred_region
          %399 = dma.done %s392, 64
        $region68: #{tpu_custom_call.1} parent=55 // pred_fallthru
          _
        // Predicated region
        $region69: #{tpu_custom_call.1} parent=55 // pred_check
          %p400 = pneg %p124
        $region70: #{tpu_custom_call.1} parent=55 // pred_check_branch
          %402 = sbr.rel (%p400) target = $region72
        $region71: #{tpu_custom_call.1} parent=55 // pred_region
          %403 = dma.done [#allocation9], 256
        $region72: #{tpu_custom_call.1} parent=55 // pred_fallthru
          _
        // Predicated region
        $region73: #{tpu_custom_call.1} parent=55 // pred_check
          %p404 = pneg %p208
        $region74: #{tpu_custom_call.1} parent=55 // pred_check_branch
          %406 = sbr.rel (%p404) target = $region76
        $region75: #{tpu_custom_call.1} parent=55 // pred_region
          %407 = dma.done [#allocation9], 256
        $region76: #{tpu_custom_call.1} parent=55 // pred_fallthru
          _
        %s408 = sand.u32 %s38, 1
        %s409 = scalar_lea.sflag [#allocation3], %s408
        %s410 = sand.u32 %s38, 1
        %s411 = smul.addr %s410, 4
        %s412 = scalar_lea.vmem [#allocation2], %s411
        %p413 = pneg %p51
        %p414 = pneg %p48
        %s415 = sand.u32 %s30, 1
        %s416 = scalar_lea.sflag [#allocation6], %s415
        %s417 = sand.u32 %s64, 1
        %s418 = smul.addr %s417, 4
        %s419 = scalar_lea.vmem [#allocation5], %s418
        %p420 = pneg %p77
        %p421 = pneg %p74
        %s422 = sand.u32 %s30, 1
        %s423 = scalar_lea.sflag [#allocation6], %s422
        %s424 = sand.u32 %s90, 1
        %s425 = smul.addr %s424, 4
        %s426 = scalar_lea.vmem [#allocation7], %s425
        %p427 = pneg %p103
        %p428 = pneg %p100
        %p429 = pneg %p124
        %p430 = pneg %p121
        %p431 = pneg %p145
        %p432 = pneg %p142
        %p433 = pneg %p166
        %p434 = pneg %p163
        %p435 = pneg %p187
        %p436 = pneg %p184
        %p437 = pneg %p208
        %p438 = pneg %p205
        %p439 = pneg %p229
        %p440 = pneg %p226
        %p441 = pneg %p255
        %p442 = pneg %p252
        %s443 = sand.u32 %s242, 1
        %s444 = scalar_lea.sflag [#allocation4], %s443
        %s445 = sand.u32 %s242, 1
        %s446 = smul.addr %s445, 8
        %s447 = scalar_lea.vmem [#allocation11], %s446
        %v449 = vld [vmem:[%s377] sm:$0xf]
        %v450 = vld [vmem:[%s386] sm:$0xf]
        %v451 = vld [vmem:[%s5] sm:$0xf]
        %v452 = vld [vmem:[%s5 + $0x4] sm:$0xf]
        %v453 = vld [vmem:[%s5 + $0x8] sm:$0xf]
        %v454 = vld [vmem:[%s5 + $0xc] sm:$0xf]
        %v455 = vld [vmem:[%s6] sm:$0x1]
        %v457 = vlaneseq
        %v458 = vshrl.u32 %v457, 7
        %v459 = vsub.s32 0, %v458
        %v460 = vrot.slane %v455, %v459
        %v466 = vunpack.c.l.b16 %v451
        %v467 = vunpack.c.l.b16 %v452
        %v468 = vunpack.c.l.b16 %v453
        %v469 = vunpack.c.l.b16 %v454
        %v470 = vpack.c.b16 %v467, %v466
        %v471 = vpack.c.b16 %v469, %v468
        %vm474 = vcmask 261120
        %v476 = vsel %vm474, %v449, 0
        %478 = vmatprep.subr.bf16.mxu0 0
        %479 = vmatpush1.bf16.msra.mxu0 %v470
        %480 = vmatprep.subr.bf16.mxu0 0
        %481 = vmatpush1.bf16.msra.mxu0 %v471
        %482 = vmatprep.subr.bf16.mxu0 0
        %483 = vmatpush1.bf16.msra.mxu0 0
        %484 = vmatprep.subr.bf16.mxu0 0
        %485 = vmatpush1.bf16.msra.mxu0 0
        %486 = vmatprep.subr.bf16.mxu0 0
        %487 = vmatpush1.bf16.msra.mxu0 0
        %488 = vmatprep.subr.bf16.mxu0 0
        %489 = vmatpush1.bf16.msra.mxu0 0
        %490 = vmatprep.subr.bf16.mxu0 0
        %491 = vmatpush1.bf16.msra.mxu0 0
        %492 = vmatprep.subr.bf16.mxu0 0
        %493 = vmatpush1.bf16.msra.mxu0 0
        %494 = vmatprep.subr.bf16.mxu0 0
        %495 = vmatpush1.bf16.msra.mxu0 0
        %496 = vmatprep.subr.bf16.mxu0 0
        %497 = vmatpush1.bf16.msra.mxu0 0
        %498 = vmatprep.subr.bf16.mxu0 0
        %499 = vmatpush1.bf16.msra.mxu0 0
        %500 = vmatprep.subr.bf16.mxu0 0
        %501 = vmatpush1.bf16.msra.mxu0 0
        %502 = vmatprep.subr.bf16.mxu0 0
        %503 = vmatpush1.bf16.msra.mxu0 0
        %504 = vmatprep.subr.bf16.mxu0 0
        %505 = vmatpush1.bf16.msra.mxu0 0
        %506 = vmatprep.subr.bf16.mxu0 0
        %507 = vmatpush1.bf16.msra.mxu0 0
        %508 = vmatprep.subr.bf16.mxu0 0
        %509 = vmatpush1.bf16.msra.mxu0 0
        %510 = vmatprep.mubr.bf16.mxu0 0
        %511 = vmatmul.mubr.bf16.gmra.mrb[0].mxu0 %v476
        %v512 = vpop.f32.mrb[0].mxu0
        %v513 = vadd.f32 %v460, %v512
        %v514 = vpop.f32.mrb[0].mxu0
        %v515 = vpop.f32.mrb[0].mxu0
        %v516 = vpop.f32.mrb[0].mxu0
        %517 = vdwg.mxu0
        %v518 = vpack.c.bf16 %v513, %v513
        %v519 = vld [vmem:[#allocation8] sm:$0xf]
        %v520 = vld [vmem:[#allocation8 + $0x4] sm:$0xf]
        %v521 = vld [vmem:[#allocation8 + $0x8] sm:$0xf]
        %v522 = vld [vmem:[#allocation8 + $0xc] sm:$0xf]
        %v523 = vld [vmem:[%s4] sm:$0x1]
        %v525 = vlaneseq
        %v526 = vshrl.u32 %v525, 7
        %v527 = vsub.s32 0, %v526
        %v528 = vrot.slane %v523, %v527
        %v534 = vunpack.c.l.b16 %v519
        %v535 = vunpack.c.l.b16 %v520
        %v536 = vunpack.c.l.b16 %v521
        %v537 = vunpack.c.l.b16 %v522
        %v538 = vpack.c.b16 %v535, %v534
        %v539 = vpack.c.b16 %v537, %v536
        %v543 = vsel %vm474, %v450, 0
        %545 = vmatprep.subr.bf16.mxu0 0
        %546 = vmatpush1.bf16.msra.mxu0 %v538
        %547 = vmatprep.subr.bf16.mxu0 0
        %548 = vmatpush1.bf16.msra.mxu0 %v539
        %549 = vmatprep.subr.bf16.mxu0 0
        %550 = vmatpush1.bf16.msra.mxu0 0
        %551 = vmatprep.subr.bf16.mxu0 0
        %552 = vmatpush1.bf16.msra.mxu0 0
        %553 = vmatprep.subr.bf16.mxu0 0
        %554 = vmatpush1.bf16.msra.mxu0 0
        %555 = vmatprep.subr.bf16.mxu0 0
        %556 = vmatpush1.bf16.msra.mxu0 0
        %557 = vmatprep.subr.bf16.mxu0 0
        %558 = vmatpush1.bf16.msra.mxu0 0
        %559 = vmatprep.subr.bf16.mxu0 0
        %560 = vmatpush1.bf16.msra.mxu0 0
        %561 = vmatprep.subr.bf16.mxu0 0
        %562 = vmatpush1.bf16.msra.mxu0 0
        %563 = vmatprep.subr.bf16.mxu0 0
        %564 = vmatpush1.bf16.msra.mxu0 0
        %565 = vmatprep.subr.bf16.mxu0 0
        %566 = vmatpush1.bf16.msra.mxu0 0
        %567 = vmatprep.subr.bf16.mxu0 0
        %568 = vmatpush1.bf16.msra.mxu0 0
        %569 = vmatprep.subr.bf16.mxu0 0
        %570 = vmatpush1.bf16.msra.mxu0 0
        %571 = vmatprep.subr.bf16.mxu0 0
        %572 = vmatpush1.bf16.msra.mxu0 0
        %573 = vmatprep.subr.bf16.mxu0 0
        %574 = vmatpush1.bf16.msra.mxu0 0
        %575 = vmatprep.subr.bf16.mxu0 0
        %576 = vmatpush1.bf16.msra.mxu0 0
        %577 = vmatprep.mubr.bf16.mxu0 0
        %578 = vmatmul.mubr.bf16.gmra.mrb[0].mxu0 %v543
        %v579 = vpop.f32.mrb[0].mxu0
        %v580 = vadd.f32 %v528, %v579
        %v581 = vpop.f32.mrb[0].mxu0
        %v582 = vpop.f32.mrb[0].mxu0
        %v583 = vpop.f32.mrb[0].mxu0
        %584 = vdwg.mxu0
        %v585 = vpack.c.bf16 %v580, %v580
        %587 = vrot.lane.b32.xlu0 %v585, 120
        %v588 = vpop.permute.xlu0 %587
        %589 = vrot.lane.b32.xlu0 %v585, 112
        %v590 = vpop.permute.xlu0 %589
        %591 = vrot.lane.b32.xlu0 %v585, 104
        %v592 = vpop.permute.xlu0 %591
        %594 = vrot.lane.b32.xlu0 %v518, 120
        %v595 = vpop.permute.xlu0 %594
        %596 = vrot.lane.b32.xlu0 %v518, 112
        %v597 = vpop.permute.xlu0 %596
        %598 = vrot.lane.b32.xlu0 %v518, 104
        %v599 = vpop.permute.xlu0 %598
        %vm600 = vcmask 64512
        %v602 = vsel %vm600, %v585, 0
        %v605 = vsel %vm600, %v518, 0
        %607 = vmatprep.subr.bf16.mxu0 0
        %608 = vmatpush1.bf16.xpose.msra.mxu0 %v605
        %609 = vmatprep.subr.bf16.mxu0 0
        %610 = vmatpush1.bf16.xpose.msra.mxu0 0
        %611 = vmatprep.subr.bf16.mxu0 0
        %612 = vmatpush1.bf16.xpose.msra.mxu0 0
        %613 = vmatprep.subr.bf16.mxu0 0
        %614 = vmatpush1.bf16.xpose.msra.mxu0 0
        %615 = vmatprep.subr.bf16.mxu0 0
        %616 = vmatpush1.bf16.xpose.msra.mxu0 0
        %617 = vmatprep.subr.bf16.mxu0 0
        %618 = vmatpush1.bf16.xpose.msra.mxu0 0
        %619 = vmatprep.subr.bf16.mxu0 0
        %620 = vmatpush1.bf16.xpose.msra.mxu0 0
        %621 = vmatprep.subr.bf16.mxu0 0
        %622 = vmatpush1.bf16.xpose.msra.mxu0 0
        %623 = vmatprep.subr.bf16.mxu0 0
        %624 = vmatpush1.bf16.xpose.msra.mxu0 0
        %625 = vmatprep.subr.bf16.mxu0 0
        %626 = vmatpush1.bf16.xpose.msra.mxu0 0
        %627 = vmatprep.subr.bf16.mxu0 0
        %628 = vmatpush1.bf16.xpose.msra.mxu0 0
        %629 = vmatprep.subr.bf16.mxu0 0
        %630 = vmatpush1.bf16.xpose.msra.mxu0 0
        %631 = vmatprep.subr.bf16.mxu0 0
        %632 = vmatpush1.bf16.xpose.msra.mxu0 0
        %633 = vmatprep.subr.bf16.mxu0 0
        %634 = vmatpush1.bf16.xpose.msra.mxu0 0
        %635 = vmatprep.subr.bf16.mxu0 0
        %636 = vmatpush1.bf16.xpose.msra.mxu0 0
        %637 = vmatprep.subr.bf16.mxu0 0
        %638 = vmatpush1.bf16.xpose.msra.mxu0 0
        %639 = vmatprep.mubr.bf16.mxu0 0
        %640 = vmatmul.mubr.bf16.gmra.mrb[0].mxu0 %v602
        %v641 = vpop.f32.mrb[0].mxu0
        %v642 = vadd.f32 0.0, %v641
        %v643 = vpop.f32.mrb[0].mxu0
        %v644 = vpop.f32.mrb[0].mxu0
        %v645 = vpop.f32.mrb[0].mxu0
        %646 = vdwg.mxu0
        %v648 = vsel %vm600, %v588, 0
        %v651 = vsel %vm600, %v595, 0
        %653 = vmatprep.subr.bf16.mxu0 0
        %654 = vmatpush1.bf16.xpose.msra.mxu0 %v651
        %655 = vmatprep.subr.bf16.mxu0 0
        %656 = vmatpush1.bf16.xpose.msra.mxu0 0
        %657 = vmatprep.subr.bf16.mxu0 0
        %658 = vmatpush1.bf16.xpose.msra.mxu0 0
        %659 = vmatprep.subr.bf16.mxu0 0
        %660 = vmatpush1.bf16.xpose.msra.mxu0 0
        %661 = vmatprep.subr.bf16.mxu0 0
        %662 = vmatpush1.bf16.xpose.msra.mxu0 0
        %663 = vmatprep.subr.bf16.mxu0 0
        %664 = vmatpush1.bf16.xpose.msra.mxu0 0
        %665 = vmatprep.subr.bf16.mxu0 0
        %666 = vmatpush1.bf16.xpose.msra.mxu0 0
        %667 = vmatprep.subr.bf16.mxu0 0
        %668 = vmatpush1.bf16.xpose.msra.mxu0 0
        %669 = vmatprep.subr.bf16.mxu0 0
        %670 = vmatpush1.bf16.xpose.msra.mxu0 0
        %671 = vmatprep.subr.bf16.mxu0 0
        %672 = vmatpush1.bf16.xpose.msra.mxu0 0
        %673 = vmatprep.subr.bf16.mxu0 0
        %674 = vmatpush1.bf16.xpose.msra.mxu0 0
        %675 = vmatprep.subr.bf16.mxu0 0
        %676 = vmatpush1.bf16.xpose.msra.mxu0 0
        %677 = vmatprep.subr.bf16.mxu0 0
        %678 = vmatpush1.bf16.xpose.msra.mxu0 0
        %679 = vmatprep.subr.bf16.mxu0 0
        %680 = vmatpush1.bf16.xpose.msra.mxu0 0
        %681 = vmatprep.subr.bf16.mxu0 0
        %682 = vmatpush1.bf16.xpose.msra.mxu0 0
        %683 = vmatprep.subr.bf16.mxu0 0
        %684 = vmatpush1.bf16.xpose.msra.mxu0 0
        %685 = vmatprep.mubr.bf16.mxu0 0
        %686 = vmatmul.mubr.bf16.gmra.mrb[0].mxu0 %v648
        %v687 = vpop.f32.mrb[0].mxu0
        %v688 = vadd.f32 0.0, %v687
        %v689 = vpop.f32.mrb[0].mxu0
        %v690 = vpop.f32.mrb[0].mxu0
        %v691 = vpop.f32.mrb[0].mxu0
        %692 = vdwg.mxu0
        %v694 = vsel %vm600, %v590, 0
        %v697 = vsel %vm600, %v597, 0
        %699 = vmatprep.subr.bf16.mxu0 0
        %700 = vmatpush1.bf16.xpose.msra.mxu0 %v697
        %701 = vmatprep.subr.bf16.mxu0 0
        %702 = vmatpush1.bf16.xpose.msra.mxu0 0
        %703 = vmatprep.subr.bf16.mxu0 0
        %704 = vmatpush1.bf16.xpose.msra.mxu0 0
        %705 = vmatprep.subr.bf16.mxu0 0
        %706 = vmatpush1.bf16.xpose.msra.mxu0 0
        %707 = vmatprep.subr.bf16.mxu0 0
        %708 = vmatpush1.bf16.xpose.msra.mxu0 0
        %709 = vmatprep.subr.bf16.mxu0 0
        %710 = vmatpush1.bf16.xpose.msra.mxu0 0
        %711 = vmatprep.subr.bf16.mxu0 0
        %712 = vmatpush1.bf16.xpose.msra.mxu0 0
        %713 = vmatprep.subr.bf16.mxu0 0
        %714 = vmatpush1.bf16.xpose.msra.mxu0 0
        %715 = vmatprep.subr.bf16.mxu0 0
        %716 = vmatpush1.bf16.xpose.msra.mxu0 0
        %717 = vmatprep.subr.bf16.mxu0 0
        %718 = vmatpush1.bf16.xpose.msra.mxu0 0
        %719 = vmatprep.subr.bf16.mxu0 0
        %720 = vmatpush1.bf16.xpose.msra.mxu0 0
        %721 = vmatprep.subr.bf16.mxu0 0
        %722 = vmatpush1.bf16.xpose.msra.mxu0 0
        %723 = vmatprep.subr.bf16.mxu0 0
        %724 = vmatpush1.bf16.xpose.msra.mxu0 0
        %725 = vmatprep.subr.bf16.mxu0 0
        %726 = vmatpush1.bf16.xpose.msra.mxu0 0
        %727 = vmatprep.subr.bf16.mxu0 0
        %728 = vmatpush1.bf16.xpose.msra.mxu0 0
        %729 = vmatprep.subr.bf16.mxu0 0
        %730 = vmatpush1.bf16.xpose.msra.mxu0 0
        %731 = vmatprep.mubr.bf16.mxu0 0
        %732 = vmatmul.mubr.bf16.gmra.mrb[0].mxu0 %v694
        %v733 = vpop.f32.mrb[0].mxu0
        %v734 = vadd.f32 0.0, %v733
        %v735 = vpop.f32.mrb[0].mxu0
        %v736 = vpop.f32.mrb[0].mxu0
        %v737 = vpop.f32.mrb[0].mxu0
        %738 = vdwg.mxu0
        %v740 = vsel %vm600, %v592, 0
        %v743 = vsel %vm600, %v599, 0
        %745 = vmatprep.subr.bf16.mxu0 0
        %746 = vmatpush1.bf16.xpose.msra.mxu0 %v743
        %747 = vmatprep.subr.bf16.mxu0 0
        %748 = vmatpush1.bf16.xpose.msra.mxu0 0
        %749 = vmatprep.subr.bf16.mxu0 0
        %750 = vmatpush1.bf16.xpose.msra.mxu0 0
        %751 = vmatprep.subr.bf16.mxu0 0
        %752 = vmatpush1.bf16.xpose.msra.mxu0 0
        %753 = vmatprep.subr.bf16.mxu0 0
        %754 = vmatpush1.bf16.xpose.msra.mxu0 0
        %755 = vmatprep.subr.bf16.mxu0 0
        %756 = vmatpush1.bf16.xpose.msra.mxu0 0
        %757 = vmatprep.subr.bf16.mxu0 0
        %758 = vmatpush1.bf16.xpose.msra.mxu0 0
        %759 = vmatprep.subr.bf16.mxu0 0
        %760 = vmatpush1.bf16.xpose.msra.mxu0 0
        %761 = vmatprep.subr.bf16.mxu0 0
        %762 = vmatpush1.bf16.xpose.msra.mxu0 0
        %763 = vmatprep.subr.bf16.mxu0 0
        %764 = vmatpush1.bf16.xpose.msra.mxu0 0
        %765 = vmatprep.subr.bf16.mxu0 0
        %766 = vmatpush1.bf16.xpose.msra.mxu0 0
        %767 = vmatprep.subr.bf16.mxu0 0
        %768 = vmatpush1.bf16.xpose.msra.mxu0 0
        %769 = vmatprep.subr.bf16.mxu0 0
        %770 = vmatpush1.bf16.xpose.msra.mxu0 0
        %771 = vmatprep.subr.bf16.mxu0 0
        %772 = vmatpush1.bf16.xpose.msra.mxu0 0
        %773 = vmatprep.subr.bf16.mxu0 0
        %774 = vmatpush1.bf16.xpose.msra.mxu0 0
        %775 = vmatprep.subr.bf16.mxu0 0
        %776 = vmatpush1.bf16.xpose.msra.mxu0 0
        %777 = vmatprep.mubr.bf16.mxu0 0
        %778 = vmatmul.mubr.bf16.gmra.mrb[0].mxu0 %v740
        %v779 = vpop.f32.mrb[0].mxu0
        %v780 = vadd.f32 0.0, %v779
        %v781 = vpop.f32.mrb[0].mxu0
        %v782 = vpop.f32.mrb[0].mxu0
        %v783 = vpop.f32.mrb[0].mxu0
        %784 = vdwg.mxu0
        %v785 = vld [vmem:[%s395] sm:$0xf]
        %v786 = vunpack.c.l.bf16 %v785
        %v787 = vadd.f32 %v642, %v786
        %v788 = vadd.f32 %v688, %v786
        %v789 = vadd.f32 %v734, %v786
        %v790 = vadd.f32 %v780, %v786
        %v791 = vsel %vm600, %v787, -inf
        %792 = vmax.xlane.f32.xlu0 %v791
        %v793 = vpop.xlane.xlu0 %792
        %v794 = vsel %vm600, %v788, -inf
        %795 = vmax.xlane.f32.xlu0 %v794
        %v796 = vpop.xlane.xlu0 %795
        %v797 = vsel %vm600, %v789, -inf
        %798 = vmax.xlane.f32.xlu0 %v797
        %v799 = vpop.xlane.xlu0 %798
        %v800 = vsel %vm600, %v790, -inf
        %801 = vmax.xlane.f32.xlu0 %v800
        %v802 = vpop.xlane.xlu0 %801
        %v803 = vsub.f32 %v787, %v793
        %v804 = vsub.f32 %v788, %v796
        %v805 = vsub.f32 %v789, %v799
        %v806 = vsub.f32 %v790, %v802
        %v807 = vmul.f32 %v803, 1.442695
        %v808 = vpow.pop %v807
        %v809 = vmul.f32 %v804, 1.442695
        %v810 = vpow.pop %v809
        %v811 = vmul.f32 %v805, 1.442695
        %v812 = vpow.pop %v811
        %v813 = vmul.f32 %v806, 1.442695
        %v814 = vpow.pop %v813
        %v815 = vsel %vm600, %v808, 0.0
        %816 = vadd.xlane.f32.xlu0 %v815
        %v817 = vpop.xlane.xlu0 %816
        %v818 = vsel %vm600, %v810, 0.0
        %819 = vadd.xlane.f32.xlu0 %v818
        %v820 = vpop.xlane.xlu0 %819
        %v821 = vsel %vm600, %v812, 0.0
        %822 = vadd.xlane.f32.xlu0 %v821
        %v823 = vpop.xlane.xlu0 %822
        %v824 = vsel %vm600, %v814, 0.0
        %825 = vadd.xlane.f32.xlu0 %v824
        %v826 = vpop.xlane.xlu0 %825
        %v827 = vrcp.pop %v817
        %v828 = vrcp.pop %v820
        %v829 = vrcp.pop %v823
        %v830 = vrcp.pop %v826
        %v831 = vmul.f32 %v808, %v827
        %v832 = vmul.f32 %v810, %v828
        %v833 = vmul.f32 %v812, %v829
        %v834 = vmul.f32 %v814, %v830
        %v835 = vpack.c.bf16 %v831, %v831
        %v836 = vpack.c.bf16 %v832, %v832
        %v837 = vpack.c.bf16 %v833, %v833
        %v838 = vpack.c.bf16 %v834, %v834
        %839 = vrot.lane.b32.xlu0 %v518, 96
        %v840 = vpop.permute.xlu0 %839
        %v842 = vsel %vm600, %v835, 0
        %vm844 = vcmask 1043456
        %v846 = vsel %vm844, %v840, 0
        %848 = vmatprep.subr.bf16.mxu0 0
        %849 = vmatpush1.bf16.msra.mxu0 %v846
        %850 = vmatprep.subr.bf16.mxu0 0
        %851 = vmatpush1.bf16.msra.mxu0 0
        %852 = vmatprep.subr.bf16.mxu0 0
        %853 = vmatpush1.bf16.msra.mxu0 0
        %854 = vmatprep.subr.bf16.mxu0 0
        %855 = vmatpush1.bf16.msra.mxu0 0
        %856 = vmatprep.subr.bf16.mxu0 0
        %857 = vmatpush1.bf16.msra.mxu0 0
        %858 = vmatprep.subr.bf16.mxu0 0
        %859 = vmatpush1.bf16.msra.mxu0 0
        %860 = vmatprep.subr.bf16.mxu0 0
        %861 = vmatpush1.bf16.msra.mxu0 0
        %862 = vmatprep.subr.bf16.mxu0 0
        %863 = vmatpush1.bf16.msra.mxu0 0
        %864 = vmatprep.subr.bf16.mxu0 0
        %865 = vmatpush1.bf16.msra.mxu0 0
        %866 = vmatprep.subr.bf16.mxu0 0
        %867 = vmatpush1.bf16.msra.mxu0 0
        %868 = vmatprep.subr.bf16.mxu0 0
        %869 = vmatpush1.bf16.msra.mxu0 0
        %870 = vmatprep.subr.bf16.mxu0 0
        %871 = vmatpush1.bf16.msra.mxu0 0
        %872 = vmatprep.subr.bf16.mxu0 0
        %873 = vmatpush1.bf16.msra.mxu0 0
        %874 = vmatprep.subr.bf16.mxu0 0
        %875 = vmatpush1.bf16.msra.mxu0 0
        %876 = vmatprep.subr.bf16.mxu0 0
        %877 = vmatpush1.bf16.msra.mxu0 0
        %878 = vmatprep.subr.bf16.mxu0 0
        %879 = vmatpush1.bf16.msra.mxu0 0
        %880 = vmatprep.mubr.bf16.mxu0 0
        %881 = vmatmul.mubr.bf16.gmra.mrb[0].mxu0 %v842
        %v882 = vpop.f32.mrb[0].mxu0
        %v883 = vadd.f32 0.0, %v882
        %v884 = vpop.f32.mrb[0].mxu0
        %v885 = vpop.f32.mrb[0].mxu0
        %v886 = vpop.f32.mrb[0].mxu0
        %887 = vdwg.mxu0
        %888 = vrot.lane.b32.xlu0 %v595, 96
        %v889 = vpop.permute.xlu0 %888
        %v891 = vsel %vm600, %v836, 0
        %v894 = vsel %vm844, %v889, 0
        %896 = vmatprep.subr.bf16.mxu0 0
        %897 = vmatpush1.bf16.msra.mxu0 %v894
        %898 = vmatprep.subr.bf16.mxu0 0
        %899 = vmatpush1.bf16.msra.mxu0 0
        %900 = vmatprep.subr.bf16.mxu0 0
        %901 = vmatpush1.bf16.msra.mxu0 0
        %902 = vmatprep.subr.bf16.mxu0 0
        %903 = vmatpush1.bf16.msra.mxu0 0
        %904 = vmatprep.subr.bf16.mxu0 0
        %905 = vmatpush1.bf16.msra.mxu0 0
        %906 = vmatprep.subr.bf16.mxu0 0
        %907 = vmatpush1.bf16.msra.mxu0 0
        %908 = vmatprep.subr.bf16.mxu0 0
        %909 = vmatpush1.bf16.msra.mxu0 0
        %910 = vmatprep.subr.bf16.mxu0 0
        %911 = vmatpush1.bf16.msra.mxu0 0
        %912 = vmatprep.subr.bf16.mxu0 0
        %913 = vmatpush1.bf16.msra.mxu0 0
        %914 = vmatprep.subr.bf16.mxu0 0
        %915 = vmatpush1.bf16.msra.mxu0 0
        %916 = vmatprep.subr.bf16.mxu0 0
        %917 = vmatpush1.bf16.msra.mxu0 0
        %918 = vmatprep.subr.bf16.mxu0 0
        %919 = vmatpush1.bf16.msra.mxu0 0
        %920 = vmatprep.subr.bf16.mxu0 0
        %921 = vmatpush1.bf16.msra.mxu0 0
        %922 = vmatprep.subr.bf16.mxu0 0
        %923 = vmatpush1.bf16.msra.mxu0 0
        %924 = vmatprep.subr.bf16.mxu0 0
        %925 = vmatpush1.bf16.msra.mxu0 0
        %926 = vmatprep.subr.bf16.mxu0 0
        %927 = vmatpush1.bf16.msra.mxu0 0
        %928 = vmatprep.mubr.bf16.mxu0 0
        %929 = vmatmul.mubr.bf16.gmra.mrb[0].mxu0 %v891
        %v930 = vpop.f32.mrb[0].mxu0
        %v931 = vadd.f32 0.0, %v930
        %v932 = vpop.f32.mrb[0].mxu0
        %v933 = vpop.f32.mrb[0].mxu0
        %v934 = vpop.f32.mrb[0].mxu0
        %935 = vdwg.mxu0
        %936 = vrot.lane.b32.xlu0 %v597, 96
        %v937 = vpop.permute.xlu0 %936
        %v939 = vsel %vm600, %v837, 0
        %v942 = vsel %vm844, %v937, 0
        %944 = vmatprep.subr.bf16.mxu0 0
        %945 = vmatpush1.bf16.msra.mxu0 %v942
        %946 = vmatprep.subr.bf16.mxu0 0
        %947 = vmatpush1.bf16.msra.mxu0 0
        %948 = vmatprep.subr.bf16.mxu0 0
        %949 = vmatpush1.bf16.msra.mxu0 0
        %950 = vmatprep.subr.bf16.mxu0 0
        %951 = vmatpush1.bf16.msra.mxu0 0
        %952 = vmatprep.subr.bf16.mxu0 0
        %953 = vmatpush1.bf16.msra.mxu0 0
        %954 = vmatprep.subr.bf16.mxu0 0
        %955 = vmatpush1.bf16.msra.mxu0 0
        %956 = vmatprep.subr.bf16.mxu0 0
        %957 = vmatpush1.bf16.msra.mxu0 0
        %958 = vmatprep.subr.bf16.mxu0 0
        %959 = vmatpush1.bf16.msra.mxu0 0
        %960 = vmatprep.subr.bf16.mxu0 0
        %961 = vmatpush1.bf16.msra.mxu0 0
        %962 = vmatprep.subr.bf16.mxu0 0
        %963 = vmatpush1.bf16.msra.mxu0 0
        %964 = vmatprep.subr.bf16.mxu0 0
        %965 = vmatpush1.bf16.msra.mxu0 0
        %966 = vmatprep.subr.bf16.mxu0 0
        %967 = vmatpush1.bf16.msra.mxu0 0
        %968 = vmatprep.subr.bf16.mxu0 0
        %969 = vmatpush1.bf16.msra.mxu0 0
        %970 = vmatprep.subr.bf16.mxu0 0
        %971 = vmatpush1.bf16.msra.mxu0 0
        %972 = vmatprep.subr.bf16.mxu0 0
        %973 = vmatpush1.bf16.msra.mxu0 0
        %974 = vmatprep.subr.bf16.mxu0 0
        %975 = vmatpush1.bf16.msra.mxu0 0
        %976 = vmatprep.mubr.bf16.mxu0 0
        %977 = vmatmul.mubr.bf16.gmra.mrb[0].mxu0 %v939
        %v978 = vpop.f32.mrb[0].mxu0
        %v979 = vadd.f32 0.0, %v978
        %v980 = vpop.f32.mrb[0].mxu0
        %v981 = vpop.f32.mrb[0].mxu0
        %v982 = vpop.f32.mrb[0].mxu0
        %983 = vdwg.mxu0
        %984 = vrot.lane.b32.xlu0 %v599, 96
        %v985 = vpop.permute.xlu0 %984
        %v987 = vsel %vm600, %v838, 0
        %v990 = vsel %vm844, %v985, 0
        %992 = vmatprep.subr.bf16.mxu0 0
        %993 = vmatpush1.bf16.msra.mxu0 %v990
        %994 = vmatprep.subr.bf16.mxu0 0
        %995 = vmatpush1.bf16.msra.mxu0 0
        %996 = vmatprep.subr.bf16.mxu0 0
        %997 = vmatpush1.bf16.msra.mxu0 0
        %998 = vmatprep.subr.bf16.mxu0 0
        %999 = vmatpush1.bf16.msra.mxu0 0
        %1000 = vmatprep.subr.bf16.mxu0 0
        %1001 = vmatpush1.bf16.msra.mxu0 0
        %1002 = vmatprep.subr.bf16.mxu0 0
        %1003 = vmatpush1.bf16.msra.mxu0 0
        %1004 = vmatprep.subr.bf16.mxu0 0
        %1005 = vmatpush1.bf16.msra.mxu0 0
        %1006 = vmatprep.subr.bf16.mxu0 0
        %1007 = vmatpush1.bf16.msra.mxu0 0
        %1008 = vmatprep.subr.bf16.mxu0 0
        %1009 = vmatpush1.bf16.msra.mxu0 0
        %1010 = vmatprep.subr.bf16.mxu0 0
        %1011 = vmatpush1.bf16.msra.mxu0 0
        %1012 = vmatprep.subr.bf16.mxu0 0
        %1013 = vmatpush1.bf16.msra.mxu0 0
        %1014 = vmatprep.subr.bf16.mxu0 0
        %1015 = vmatpush1.bf16.msra.mxu0 0
        %1016 = vmatprep.subr.bf16.mxu0 0
        %1017 = vmatpush1.bf16.msra.mxu0 0
        %1018 = vmatprep.subr.bf16.mxu0 0
        %1019 = vmatpush1.bf16.msra.mxu0 0
        %1020 = vmatprep.subr.bf16.mxu0 0
        %1021 = vmatpush1.bf16.msra.mxu0 0
        %1022 = vmatprep.subr.bf16.mxu0 0
        %1023 = vmatpush1.bf16.msra.mxu0 0
        %1024 = vmatprep.mubr.bf16.mxu0 0
        %1025 = vmatmul.mubr.bf16.gmra.mrb[0].mxu0 %v987
        %v1026 = vpop.f32.mrb[0].mxu0
        %v1027 = vadd.f32 0.0, %v1026
        %v1028 = vpop.f32.mrb[0].mxu0
        %v1029 = vpop.f32.mrb[0].mxu0
        %v1030 = vpop.f32.mrb[0].mxu0
        %1031 = vdwg.mxu0
        %v1032 = vpack.c.bf16 %v883, %v883
        %v1033 = vpack.c.bf16 %v931, %v931
        %v1034 = vpack.c.bf16 %v979, %v979
        %v1035 = vpack.c.bf16 %v1027, %v1027
        %1037 = vrot.lane.b32.xlu0 %v1033, 8
        %v1038 = vpop.permute.xlu0 %1037
        %1040 = vrot.lane.b32.xlu0 %v1034, 16
        %v1041 = vpop.permute.xlu0 %1040
        %1043 = vrot.lane.b32.xlu0 %v1035, 24
        %v1044 = vpop.permute.xlu0 %1043
        %v1047 = vsel %vm600, %v1032, %v1038
        %vm1048 = vcmask 130048
        %v1050 = vsel %vm1048, %v1047, %v1041
        %vm1051 = vcmask 195584
        %v1053 = vsel %vm1051, %v1050, %v1044
        %v1054 = vld [vmem:[#allocation10] sm:$0xf]
        %v1055 = vld [vmem:[#allocation10 + $0x4] sm:$0xf]
        %v1056 = vld [vmem:[#allocation10 + $0x8] sm:$0xf]
        %v1057 = vld [vmem:[#allocation10 + $0xc] sm:$0xf]
        %v1058 = vld [vmem:[%s8] sm:$0x1]
        %v1060 = vlaneseq
        %v1061 = vshrl.u32 %v1060, 7
        %v1062 = vsub.s32 0, %v1061
        %v1063 = vrot.slane %v1058, %v1062
        %v1069 = vunpack.c.l.b16 %v1054
        %v1070 = vunpack.c.l.b16 %v1055
        %v1071 = vunpack.c.l.b16 %v1056
        %v1072 = vunpack.c.l.b16 %v1057
        %v1073 = vpack.c.b16 %v1070, %v1069
        %v1074 = vpack.c.b16 %v1072, %v1071
        %v1077 = vsel %vm474, %v1053, 0
        %1079 = vmatprep.subr.bf16.mxu0 0
        %1080 = vmatpush1.bf16.msra.mxu0 %v1073
        %1081 = vmatprep.subr.bf16.mxu0 0
        %1082 = vmatpush1.bf16.msra.mxu0 %v1074
        %1083 = vmatprep.subr.bf16.mxu0 0
        %1084 = vmatpush1.bf16.msra.mxu0 0
        %1085 = vmatprep.subr.bf16.mxu0 0
        %1086 = vmatpush1.bf16.msra.mxu0 0
        %1087 = vmatprep.subr.bf16.mxu0 0
        %1088 = vmatpush1.bf16.msra.mxu0 0
        %1089 = vmatprep.subr.bf16.mxu0 0
        %1090 = vmatpush1.bf16.msra.mxu0 0
        %1091 = vmatprep.subr.bf16.mxu0 0
        %1092 = vmatpush1.bf16.msra.mxu0 0
        %1093 = vmatprep.subr.bf16.mxu0 0
        %1094 = vmatpush1.bf16.msra.mxu0 0
        %1095 = vmatprep.subr.bf16.mxu0 0
        %1096 = vmatpush1.bf16.msra.mxu0 0
        %1097 = vmatprep.subr.bf16.mxu0 0
        %1098 = vmatpush1.bf16.msra.mxu0 0
        %1099 = vmatprep.subr.bf16.mxu0 0
        %1100 = vmatpush1.bf16.msra.mxu0 0
        %1101 = vmatprep.subr.bf16.mxu0 0
        %1102 = vmatpush1.bf16.msra.mxu0 0
        %1103 = vmatprep.subr.bf16.mxu0 0
        %1104 = vmatpush1.bf16.msra.mxu0 0
        %1105 = vmatprep.subr.bf16.mxu0 0
        %1106 = vmatpush1.bf16.msra.mxu0 0
        %1107 = vmatprep.subr.bf16.mxu0 0
        %1108 = vmatpush1.bf16.msra.mxu0 0
        %1109 = vmatprep.subr.bf16.mxu0 0
        %1110 = vmatpush1.bf16.msra.mxu0 0
        %1111 = vmatprep.mubr.bf16.mxu0 0
        %1112 = vmatmul.mubr.bf16.gmra.mrb[0].mxu0 %v1077
        %v1113 = vpop.f32.mrb[0].mxu0
        %v1114 = vadd.f32 %v1063, %v1113
        %v1115 = vpop.f32.mrb[0].mxu0
        %v1116 = vpop.f32.mrb[0].mxu0
        %v1117 = vpop.f32.mrb[0].mxu0
        %1118 = vdwg.mxu0
        %1119 = vst.msk [vmem:[%s447] sm:$0xff] %vm474, %v1114
        %s1120 = sand.u32 %s242, 1
        %s1121 = scalar_lea.sflag [#allocation4], %s1120
        %s1122 = sand.u32 %s242, 1
        %s1123 = smul.addr %s1122, 8
        %s1124 = scalar_lea.vmem [#allocation11], %s1123
        // Predicated region
        $region77: #{tpu_custom_call.1} parent=55 // pred_check
          %p1125 = pneg %p252
        $region78: #{tpu_custom_call.1} parent=55 // pred_check_branch
          %1127 = sbr.rel (%p1125) target = $region80
        $region79: #{tpu_custom_call.1} parent=55 // pred_region
          %s1129 = ssub.s32 128, 128
          %1130 = vsyncadd %s1121, %s1129
          %s1131 = smul.addr %s30, 128
          %s1132 = scalar_lea.hbm %s9, %s1131
          %s1134 = sshll.u32 %s1124, 4
          %s1135 = int_to_ptr.vmem [resolvable:$true] %s1134
          %1137 = dma.vmem_to_hbm [thread:$0]  %s1135, 128, %s1132, %s1121
        $region80: #{tpu_custom_call.1} parent=55 // pred_fallthru
          _
      $region56: #{tpu_custom_call.1} parent=5 // pred_fallthru
        _
      %p1138 = scmp.le.s32.totalorder 2, %s25
      // Predicated region
      $region81: #{tpu_custom_call.1} parent=5 // pred_check
        %p1139 = pneg %p1138
      $region82: #{tpu_custom_call.1} parent=5 // pred_check_branch
        %1141 = sbr.rel (%p1139) target = $region84
      $region83: #{tpu_custom_call.1} parent=5 // pred_region
        %s1142 = ssub.s32 %s25, 2
        // Predicated region
        $region85: #{tpu_custom_call.1} parent=83 // pred_check
          %p1143 = pneg %p258
        $region86: #{tpu_custom_call.1} parent=83 // pred_check_branch
          %1145 = sbr.rel (%p1143) target = $region88
        $region87: #{tpu_custom_call.1} parent=83 // pred_region
          %s1146 = sand.u32 %s243, 1
          %s1147 = scalar_lea.sflag [#allocation4], %s1146
          %s1148 = sand.u32 %s243, 1
          %s1149 = smul.addr %s1148, 8
          %s1150 = scalar_lea.vmem [#allocation11], %s1149
          %1151 = dma.done %s1147, 128
        $region88: #{tpu_custom_call.1} parent=83 // pred_fallthru
          _
      $region84: #{tpu_custom_call.1} parent=5 // pred_fallthru
        _
    $region6: #{tpu_custom_call.1} parent=1 // loop_footer
      %s29 = sadd.s32 1, %s25
    $region7: #{tpu_custom_call.1} parent=1 // loop_footer_branch
      %24 = sbr.rel target = $region3
    $region8: #{tpu_custom_call.1} parent=1 // loop_exit
      _
    %1152 = vsyncpa [#allocation3], 1
    %s1153 = scalar_lea.sflag [#allocation3], 1
    %1154 = vsyncpa %s1153, 1
    %1155 = vsyncpa [#allocation6], 1
    %s1156 = scalar_lea.sflag [#allocation6], 1
    %1157 = vsyncpa %s1156, 1
    %1158 = vsyncpa [#allocation9], 1
    %1159 = vsyncpa [#allocation4], 1
    %s1160 = scalar_lea.sflag [#allocation4], 1
    %1161 = vsyncpa %s1160, 1

</llo_original>
